<compile_context>
chip_gen: v6e
topology: v6e:2x2x1
jax: 0.10.0
libtpu: 0.0.40
codegen_flags: <defaults>
</compile_context>

<pallas_src>
import numpy as np
import jax
import jax.numpy as jnp
from jax.experimental import pallas as pl
from jax.experimental.pallas import tpu as pltpu


def _make_const_kernel(h, w, k, taps):
    """Kernel with the (1/resol-scaled) stencil baked in as Python constants."""
    h_out = h - (k - 1)
    w_out = w - (k - 1)

    def kernel(x_ref, o_ref):
        # x_ref: (B, H, W) f32 VMEM block; o_ref: (B, H_out, W_out) f32 block.
        bands = [None] * k

        def band(di):
            # One row-offset band per di, loaded once and reused for every
            # column offset that needs it (zero taps never trigger a load).
            if bands[di] is None:
                bands[di] = x_ref[:, di:di + h_out, :]          # (B, H_out, W)
            return bands[di]

        # Roll hoist: accumulate per-column-offset sums across row offsets
        # first, then one lane roll per column offset (k-1 rolls per block).
        acc = None
        for dj in range(k):
            col = None
            for di in range(k):
                wij = taps[di][dj]
                if wij == 0.0:
                    continue                                    # skip zero taps
                term = wij * band(di)
                col = term if col is None else col + term
            if col is None:
                continue
            if dj:
                # shift = w - dj  ==  jnp.roll(col, -dj, axis=-1):
                # column j of the rolled value holds column j+dj of `col`.
                col = pltpu.roll(col, w - dj, 2)
            acc = col if acc is None else acc + col
        if acc is None:                                         # all-zero stencil
            acc = jnp.zeros((x_ref.shape[0], h_out, w), jnp.float32)

        # Keep only the valid columns (cols >= w_out hold wrapped values);
        # writing (B, H_out, W_out) directly avoids a post-kernel HBM slice.
        o_ref[...] = acc[:, :, :w_out]

    return kernel


def _make_smem_kernel(h, w, k):
    """Fallback kernel: stencil (already scaled by 1/resol) read from SMEM."""
    h_out = h - (k - 1)
    w_out = w - (k - 1)

    def kernel(w_ref, x_ref, o_ref):
        # w_ref: (k, k) f32 in SMEM; same roll-hoisted structure as above.
        bands = [x_ref[:, di:di + h_out, :] for di in range(k)]
        acc = None
        for dj in range(k):
            col = None
            for di in range(k):
                term = w_ref[di, dj] * bands[di]
                col = term if col is None else col + term
            if dj:
                col = pltpu.roll(col, w - dj, 2)
            acc = col if acc is None else acc + col
        o_ref[...] = acc[:, :, :w_out]

    return kernel


def _tpu_budget():
    """Generation-aware sizing: (per-step block budget, vmem_limit_bytes, #TC)."""
    phys = 64 << 20                     # conservative default = v7x VMEM size
    cores = 1
    try:
        info = pltpu.get_tpu_info()
        phys = int(getattr(info, "vmem_capacity_bytes", phys))
        for name in ("num_cores", "core_count", "tensorcore_count", "num_tensorcores"):
            v = getattr(info, name, None)
            if v:
                cores = int(v)
                break
    except Exception:
        pass
    if phys >= (128 << 20):
        # v5e / v6e: 128 MiB physical VMEM -> big blocks, raised scoped limit.
        return 24 << 20, 64 << 20, cores
    # v7x: 64 MiB physical -> keep double-buffered in+out well under ~40 MiB.
    return 12 << 20, 40 << 20, cores


def conv2d_derivative(x_nchw, der_filter, resol):
    """Pallas equivalent of Conv2dDerivative.forward.

    x_nchw: (N, 1, H, W); der_filter: (1, 1, k, k); returns (N, 1, H-k+1, W-k+1).
    """
    n, c, h, w = x_nchw.shape
    assert c == 1, "Conv2dDerivative uses a single input channel"
    k = int(der_filter.shape[-1])
    assert h >= k and w >= k, "spatial dims must be >= kernel_size"
    h_out = h - (k - 1)
    w_out = w - (k - 1)

    x = jnp.asarray(x_nchw, jnp.float32).reshape(n, h, w)       # squeeze channel

    # Fold 1/resol into the stencil; bake it in as constants when concrete.
    try:
        w_np = np.asarray(der_filter, dtype=np.float32).reshape(k, k) / float(resol)
        taps = [[float(w_np[i, j]) for j in range(k)] for i in range(k)]
    except Exception:                    # traced filter / resol (e.g. under jit)
        taps = None

    # Batch tile from a generation-aware VMEM budget; cdiv grid so awkward N
    # never degenerates to one-image steps.
    budget, vmem_limit, n_cores = _tpu_budget()
    bytes_per_img = (h * w + h_out * w_out) * 4
    b_tile = max(1, min(n, budget // max(1, bytes_per_img)))
    if n_cores >= 2 and n >= 2:
        # Keep >= 2 grid steps only where the "parallel" axis feeds >1 core.
        b_tile = min(b_tile, pl.cdiv(n, 2))
    grid = (pl.cdiv(n, b_tile),)
    # TODO(synk): for single images too large for VMEM, row-tile with a
    # (k-1)-row halo instead of whole-image blocks.

    x_spec = pl.BlockSpec((b_tile, h, w), lambda i: (i, 0, 0))
    out_spec = pl.BlockSpec((b_tile, h_out, w_out), lambda i: (i, 0, 0))

    if taps is not None:
        kernel = _make_const_kernel(h, w, k, taps)
        in_specs = [x_spec]
        operands = (x,)
    else:
        kernel = _make_smem_kernel(h, w, k)
        w2d = (jnp.asarray(der_filter, jnp.float32) / resol).reshape(k, k)
        in_specs = [pl.BlockSpec(memory_space=pltpu.MemorySpace.SMEM), x_spec]
        operands = (w2d, x)

    out = pl.pallas_call(
        kernel,
        out_shape=jax.ShapeDtypeStruct((n, h_out, w_out), jnp.float32),
        grid_spec=pltpu.PrefetchScalarGridSpec(
            num_scalar_prefetch=0,
            grid=grid,
            in_specs=in_specs,
            out_specs=out_spec,
        ),
        compiler_params=pltpu.CompilerParams(
            dimension_semantics=("parallel",),
            vmem_limit_bytes=vmem_limit,
        ),
    )(*operands)

    return out.reshape(n, 1, h_out, w_out)


def _reference(x_nchw, der_filter, resol):
    # Pure-JAX reference (cross-correlation, valid padding), for verification.
    return jax.lax.conv_general_dilated(
        jnp.asarray(x_nchw, jnp.float32), jnp.asarray(der_filter, jnp.float32),
        window_strides=(1, 1), padding="VALID",
        dimension_numbers=("NCHW", "OIHW", "NCHW"),
    ) / resol


if __name__ == "__main__":
    key = jax.random.PRNGKey(0)

    # Deterministic derivative filter (Laplacian stencil), shape (1, 1, 3, 3),
    # matching nn.Conv2d(1, 1, 3, bias=False).weight in the module.
    der_filter = jnp.array(
        [[[[0.0, 1.0, 0.0],
           [1.0, -4.0, 1.0],
           [0.0, 1.0, 0.0]]]], dtype=jnp.float32)
    resol = (1.0 / 16.0) ** 2          # example spatial resolution (dx**2)

    # Small input consistent with the module: N=2, C=1, H=W=16.
    x = jax.random.normal(key, (2, 1, 16, 16), dtype=jnp.float32)

    y_ref = _reference(x, der_filter, resol)

    # Primary path: constant-specialized stencil.
    y = jax.block_until_ready(conv2d_derivative(x, der_filter, resol))
    assert y.shape == (2, 1, 14, 14)
    assert jnp.allclose(y, y_ref, atol=1e-4, rtol=1e-4)

    # Fallback path: filter / resol traced under jit -> SMEM-parameter kernel.
    y_traced = jax.block_until_ready(jax.jit(conv2d_derivative)(x, der_filter, resol))
    assert y_traced.shape == (2, 1, 14, 14)
    assert jnp.allclose(y_traced, y_ref, atol=1e-4, rtol=1e-4)

    print("KERNEL_OK")
</pallas_src>

<mosaic_0001>
module attributes {stable_mosaic.version = 11 : i64} {
  func.func @kernel(%arg0: i32, %arg1: memref<2x16x16xf32, #tpu.memory_space<vmem>>, %arg2: memref<2x14x14xf32, #tpu.memory_space<vmem>>) attributes {dimension_semantics = [#tpu.dimension_semantics<parallel>], iteration_bounds = array<i64: 1>, scalar_prefetch = 0 : i64, scratch_operands = 0 : i64, tpu.core_type = #tpu.core_type<tc>, window_params = [{transform_indices = @transform_0, window_bounds = array<i64: 2, 16, 16>}, {transform_indices = @transform_1, window_bounds = array<i64: 2, 14, 14>}]} {
    %c0 = arith.constant 0 : index
    %c1 = arith.constant 1 : index
    %c0_0 = arith.constant 0 : index
    %0 = vector.load %arg1[%c0, %c1, %c0_0] : memref<2x16x16xf32, #tpu.memory_space<vmem>>, vector<2x14x16xf32>
    %cst = arith.constant 2.560000e+02 : f32
    %1 = vector.broadcast %cst : f32 to vector<2x14x16xf32>
    %2 = arith.mulf %1, %0 : vector<2x14x16xf32>
    %c0_1 = arith.constant 0 : index
    %c0_2 = arith.constant 0 : index
    %c0_3 = arith.constant 0 : index
    %3 = vector.load %arg1[%c0_1, %c0_2, %c0_3] : memref<2x16x16xf32, #tpu.memory_space<vmem>>, vector<2x14x16xf32>
    %cst_4 = arith.constant 2.560000e+02 : f32
    %4 = vector.broadcast %cst_4 : f32 to vector<2x14x16xf32>
    %5 = arith.mulf %4, %3 : vector<2x14x16xf32>
    %cst_5 = arith.constant -1.024000e+03 : f32
    %6 = vector.broadcast %cst_5 : f32 to vector<2x14x16xf32>
    %7 = arith.mulf %6, %0 : vector<2x14x16xf32>
    %8 = arith.addf %5, %7 : vector<2x14x16xf32>
    %c0_6 = arith.constant 0 : index
    %c2 = arith.constant 2 : index
    %c0_7 = arith.constant 0 : index
    %9 = vector.load %arg1[%c0_6, %c2, %c0_7] : memref<2x16x16xf32, #tpu.memory_space<vmem>>, vector<2x14x16xf32>
    %cst_8 = arith.constant 2.560000e+02 : f32
    %10 = vector.broadcast %cst_8 : f32 to vector<2x14x16xf32>
    %11 = arith.mulf %10, %9 : vector<2x14x16xf32>
    %12 = arith.addf %8, %11 : vector<2x14x16xf32>
    %c15_i32 = arith.constant 15 : i32
    %13 = tpu.dynamic_rotate %12 by %c15_i32 dim 2 : vector<2x14x16xf32>, i32 -> vector<2x14x16xf32>
    %14 = arith.addf %2, %13 : vector<2x14x16xf32>
    %cst_9 = arith.constant 2.560000e+02 : f32
    %15 = vector.broadcast %cst_9 : f32 to vector<2x14x16xf32>
    %16 = arith.mulf %15, %0 : vector<2x14x16xf32>
    %c14_i32 = arith.constant 14 : i32
    %17 = tpu.dynamic_rotate %16 by %c14_i32 dim 2 : vector<2x14x16xf32>, i32 -> vector<2x14x16xf32>
    %18 = arith.addf %14, %17 : vector<2x14x16xf32>
    %19 = vector.extract_strided_slice %18 {offsets = [0, 0, 0], sizes = [2, 14, 14], strides = [1, 1, 1]} : vector<2x14x16xf32> to vector<2x14x14xf32>
    %c0_10 = arith.constant 0 : index
    %c0_11 = arith.constant 0 : index
    %c0_12 = arith.constant 0 : index
    %20 = vector.load %arg2[%c0_10, %c0_11, %c0_12] : memref<2x14x14xf32, #tpu.memory_space<vmem>>, vector<2x14x14xf32>
    tpu.vector_store %arg2[%c0_10, %c0_11, %c0_12], %19 {strides = array<i32>} : memref<2x14x14xf32, #tpu.memory_space<vmem>>, vector<2x14x14xf32>,
    return
  }
  func.func @transform_0(%arg0: i32) -> (i32, i32, i32) {
    %c0_i32 = arith.constant 0 : i32
    %c0_i32_0 = arith.constant 0 : i32
    %c0_i32_1 = arith.constant 0 : i32
    return %arg0, %c0_i32, %c0_i32_0 : i32, i32, i32
  }
  func.func @transform_1(%arg0: i32) -> (i32, i32, i32) {
    %c0_i32 = arith.constant 0 : i32
    %c0_i32_0 = arith.constant 0 : i32
    %c0_i32_1 = arith.constant 0 : i32
    return %arg0, %c0_i32, %c0_i32_0 : i32, i32, i32
  }
}

</mosaic_0001>

<llo_original>
// kernel: tpu_custom_call.1
$region0: #{tpu_custom_call.1}
  #allocation0 [shape = 'u32[]', space=smem, size = 0x4, offset = 0x4, fixed_abs, tag = 'smem constant byte address 0x4 - core index']
  #allocation1 [shape = 'u32[144,128]{1,0:T(1,128)}', space=vmem, size = 0x12000, scoped, tag = 'internal scratch']
  %s0 = inlined_call_operand.hbm [shape: f32[2,16,16], index: 0, kind: input, shape index: {}]
  %s1 = inlined_call_operand.vmem [shape: f32[2,14,14], index: 1, kind: output, shape index: {}]
  %s2 = sld [smem:[#allocation0]]
  $region18: #{tpu_custom_call.1} parent=0
    _
  %s4 = ssub.s32 1, %s2
  %s5 = scalar_select 0, %s4, %s2
  $region1: #{tpu_custom_call.1} parent=0
    #allocation2 [shape = 'u8[16384]{0}', space=vmem, size = 0x4000, scoped, tag = 'input window, operand 0, single buffered']
    #allocation3 [shape = 's32[1]{0}', space=sflag, size = 0x4, scoped, tag = 'scoped memory for tpu_custom_call.1']
    %6 = vsyncpa [#allocation3], 0
    // Predicated region
    $region2: #{tpu_custom_call.1} parent=1 // pred_check
      _
    $region3: #{tpu_custom_call.1} parent=1 // pred_check_branch
      %8 = sbr.rel (0) target = $region5
    $region4: #{tpu_custom_call.1} parent=1 // pred_region
      %s10 = ssub.s32 512, 512
      %11 = vsyncadd [#allocation3], %s10
      %s12 = sshll.u32 [#allocation2], 4
      %s13 = int_to_ptr.vmem [resolvable:$true] %s12
      %18 = dma.hbm_to_vmem [thread:$0]  %s0, 512, %s13, [#allocation3], 128, 128, 8
    $region5: #{tpu_custom_call.1} parent=1 // pred_fallthru
      _
    // Predicated region
    $region6: #{tpu_custom_call.1} parent=1 // pred_check
      _
    $region7: #{tpu_custom_call.1} parent=1 // pred_check_branch
      %20 = sbr.rel (0) target = $region9
    $region8: #{tpu_custom_call.1} parent=1 // pred_region
      %21 = dma.done [#allocation3], 512
    $region9: #{tpu_custom_call.1} parent=1 // pred_fallthru
      _
    %v22 = vld [vmem:[#allocation2 + $0x1] sm:$0xff]
    %v23 = vld [vmem:[#allocation2 + $0x9] sm:$0x3f]
    %v24 = vld [vmem:[#allocation2 + $0x11] sm:$0xff]
    %v25 = vld [vmem:[#allocation2 + $0x19] sm:$0x3f]
    %v26 = vmul.f32 %v22, 256.0
    %v27 = vmul.f32 %v23, 256.0
    %v28 = vmul.f32 %v24, 256.0
    %v29 = vmul.f32 %v25, 256.0
    %v30 = vld [vmem:[#allocation2] sm:$0xff]
    %v31 = vld [vmem:[#allocation2 + $0x8] sm:$0x3f]
    %v32 = vld [vmem:[#allocation2 + $0x10] sm:$0xff]
    %v33 = vld [vmem:[#allocation2 + $0x18] sm:$0x3f]
    %v34 = vmul.f32 %v30, 256.0
    %v35 = vmul.f32 %v31, 256.0
    %v36 = vmul.f32 %v32, 256.0
    %v37 = vmul.f32 %v33, 256.0
    %v38 = vmul.f32 %v22, -1024.0
    %v39 = vmul.f32 %v23, -1024.0
    %v40 = vmul.f32 %v24, -1024.0
    %v41 = vmul.f32 %v25, -1024.0
    %v42 = vadd.f32 %v34, %v38
    %v43 = vadd.f32 %v35, %v39
    %v44 = vadd.f32 %v36, %v40
    %v45 = vadd.f32 %v37, %v41
    %v46 = vld [vmem:[#allocation2 + $0x2] sm:$0xff]
    %v47 = vld [vmem:[#allocation2 + $0xa] sm:$0x3f]
    %v48 = vld [vmem:[#allocation2 + $0x12] sm:$0xff]
    %v49 = vld [vmem:[#allocation2 + $0x1a] sm:$0x3f]
    %v50 = vmul.f32 %v46, 256.0
    %v51 = vmul.f32 %v47, 256.0
    %v52 = vmul.f32 %v48, 256.0
    %v53 = vmul.f32 %v49, 256.0
    %v54 = vadd.f32 %v42, %v50
    %v55 = vadd.f32 %v43, %v51
    %v56 = vadd.f32 %v44, %v52
    %v57 = vadd.f32 %v45, %v53
    %vm58 = vcmask 1047680
    %59 = vrot.lane.b32.xlu0 %v54, 16
    %v60 = vpop.permute.xlu0 %59
    %v61 = vsel %vm58, %v60, %v54
    %62 = vrot.lane.b32.xlu0 %v55, 16
    %v63 = vpop.permute.xlu0 %62
    %v64 = vsel %vm58, %v63, %v55
    %65 = vrot.lane.b32.xlu0 %v56, 16
    %v66 = vpop.permute.xlu0 %65
    %v67 = vsel %vm58, %v66, %v56
    %68 = vrot.lane.b32.xlu0 %v57, 16
    %v69 = vpop.permute.xlu0 %68
    %v70 = vsel %vm58, %v69, %v57
    %71 = vrot.lane.b32.xlu0 %v61, 16
    %v72 = vpop.permute.xlu0 %71
    %73 = vrot.lane.b32.xlu0 %v64, 16
    %v74 = vpop.permute.xlu0 %73
    %75 = vrot.lane.b32.xlu0 %v67, 16
    %v76 = vpop.permute.xlu0 %75
    %77 = vrot.lane.b32.xlu0 %v70, 16
    %v78 = vpop.permute.xlu0 %77
    %v79 = vsel %vm58, %v72, %v54
    %v80 = vsel %vm58, %v74, %v55
    %v81 = vsel %vm58, %v76, %v56
    %v82 = vsel %vm58, %v78, %v57
    %87 = vrot.lane.b32.xlu0 %v79, 127
    %v88 = vpop.permute.xlu0 %87
    %89 = vrot.lane.b32.xlu0 %v80, 127
    %v90 = vpop.permute.xlu0 %89
    %91 = vrot.lane.b32.xlu0 %v81, 127
    %v92 = vpop.permute.xlu0 %91
    %93 = vrot.lane.b32.xlu0 %v82, 127
    %v94 = vpop.permute.xlu0 %93
    %v99 = vadd.f32 %v26, %v88
    %v100 = vadd.f32 %v27, %v90
    %v101 = vadd.f32 %v28, %v92
    %v102 = vadd.f32 %v29, %v94
    %103 = vrot.lane.b32.xlu0 %v26, 16
    %v104 = vpop.permute.xlu0 %103
    %v105 = vsel %vm58, %v104, %v26
    %106 = vrot.lane.b32.xlu0 %v27, 16
    %v107 = vpop.permute.xlu0 %106
    %v108 = vsel %vm58, %v107, %v27
    %109 = vrot.lane.b32.xlu0 %v28, 16
    %v110 = vpop.permute.xlu0 %109
    %v111 = vsel %vm58, %v110, %v28
    %112 = vrot.lane.b32.xlu0 %v29, 16
    %v113 = vpop.permute.xlu0 %112
    %v114 = vsel %vm58, %v113, %v29
    %115 = vrot.lane.b32.xlu0 %v105, 16
    %v116 = vpop.permute.xlu0 %115
    %117 = vrot.lane.b32.xlu0 %v108, 16
    %v118 = vpop.permute.xlu0 %117
    %119 = vrot.lane.b32.xlu0 %v111, 16
    %v120 = vpop.permute.xlu0 %119
    %121 = vrot.lane.b32.xlu0 %v114, 16
    %v122 = vpop.permute.xlu0 %121
    %v123 = vsel %vm58, %v116, %v26
    %v124 = vsel %vm58, %v118, %v27
    %v125 = vsel %vm58, %v120, %v28
    %v126 = vsel %vm58, %v122, %v29
    %131 = vrot.lane.b32.xlu0 %v123, 126
    %v132 = vpop.permute.xlu0 %131
    %133 = vrot.lane.b32.xlu0 %v124, 126
    %v134 = vpop.permute.xlu0 %133
    %135 = vrot.lane.b32.xlu0 %v125, 126
    %v136 = vpop.permute.xlu0 %135
    %137 = vrot.lane.b32.xlu0 %v126, 126
    %v138 = vpop.permute.xlu0 %137
    %v143 = vadd.f32 %v99, %v132
    %v144 = vadd.f32 %v100, %v134
    %v145 = vadd.f32 %v101, %v136
    %v146 = vadd.f32 %v102, %v138
    %vm147 = vcmask 113664
    %148 = vst.msk [vmem:[%s1] sm:$0xff] %vm147, %v143
    %vm149 = vcmask 111616
    %150 = vst.msk [vmem:[%s1 + $0x8] sm:$0x3f] %vm149, %v144
    %151 = vst.msk [vmem:[%s1 + $0x10] sm:$0xff] %vm147, %v145
    %152 = vst.msk [vmem:[%s1 + $0x18] sm:$0x3f] %vm149, %v146
    // Predicated region
    $region10: #{tpu_custom_call.1} parent=1 // pred_check
      _
    $region11: #{tpu_custom_call.1} parent=1 // pred_check_branch
      %154 = sbr.rel (0) target = $region13
    $region12: #{tpu_custom_call.1} parent=1 // pred_region
      _
    $region13: #{tpu_custom_call.1} parent=1 // pred_fallthru
      _
    // Predicated region
    $region14: #{tpu_custom_call.1} parent=1 // pred_check
      _
    $region15: #{tpu_custom_call.1} parent=1 // pred_check_branch
      %156 = sbr.rel (0) target = $region17
    $region16: #{tpu_custom_call.1} parent=1 // pred_region
      _
    $region17: #{tpu_custom_call.1} parent=1 // pred_fallthru
      _
    %157 = vsyncpa [#allocation3], 1

</llo_original>
